<compile_context>
chip_gen: v6e
topology: v6e:2x2x1
jax: 0.10.0
libtpu: 0.0.40
codegen_flags: <defaults>
</compile_context>

<pallas_src>
import jax
import jax.numpy as jnp
from jax import lax
from jax.experimental import pallas as pl
from jax.experimental.pallas import tpu as pltpu


def _round_up(x, m):
    return ((x + m - 1) // m) * m


def _proto_contrast_kernel(feat_ref, psum_ref, labels_ref, out_ref):
    # feat: (TILE_N, A) in input dtype; upcast for f32 accumulation math.
    feat = feat_ref[...].astype(jnp.float32)
    psum = psum_ref[...]  # (C, A) f32, already normalized / averaged / temp-scaled

    # logits^T: (C, TILE_N) — N on the lane axis (lane-dense layout).
    logits_t = lax.dot_general(
        psum, feat, (((1,), (1,)), ((), ())),
        preferred_element_type=jnp.float32)

    # Per-row squared norm as a lane-dense (1, TILE_N) row (tiny matmul),
    # then scale logits by rsqrt — identical to F.normalize(feat) pre-matmul
    # with eps=1e-12 (max(||f||,1e-12) == sqrt(max(||f||^2, 1e-24))).
    sumsq_t = lax.dot_general(
        jnp.ones((1, feat.shape[1]), jnp.float32), feat * feat,
        (((1,), (1,)), ((), ())),
        preferred_element_type=jnp.float32)                 # (1, TILE_N)
    inv_norm = lax.rsqrt(jnp.maximum(sumsq_t, 1e-24))       # (1, TILE_N)
    logits_t = logits_t * inv_norm                          # (C, TILE_N)

    # Ignore-label masking (torch filters rows; weighting gives the same mean).
    labels = labels_ref[...]                                # (1, TILE_N) int32
    valid = labels != 255
    safe = jnp.where(valid, labels, 0)

    C, T = logits_t.shape
    cls = lax.broadcasted_iota(jnp.int32, (C, T), 0)
    onehot = (cls == safe).astype(jnp.float32)              # (C, TILE_N)

    # Cross-entropy over the class (sublane) axis, lane-dense intermediates.
    m = jnp.max(logits_t, axis=0, keepdims=True)            # (1, TILE_N)
    lse = m + jnp.log(jnp.sum(jnp.exp(logits_t - m), axis=0, keepdims=True))
    picked = jnp.sum(logits_t * onehot, axis=0, keepdims=True)
    per_loss = lse - picked                                  # (1, TILE_N)

    validf = valid.astype(jnp.float32)
    loss_sum = jnp.sum(per_loss * validf)
    count = jnp.sum(validf)

    # Pack the two per-tile partials into a full lane-dense (1, 128) row.
    lane = lax.broadcasted_iota(jnp.int32, (1, 128), 1)
    out_ref[0] = jnp.where(lane == 0, loss_sum,
                           jnp.where(lane == 1, count, 0.0))


def prototype_contrastive_loss(proto_aug_num, Proto, feat, labels, *,
                               max_tile_n=2048):
    """Pallas equivalent of PrototypeContrastiveLoss.forward.

    Proto:  (proto_aug_num + 1, C, A)
    feat:   (N, A)  (any float dtype; bf16 stays bf16 over the DMA)
    labels: (N,) int, 255 == ignore
    """
    P = proto_aug_num + 1
    assert Proto.shape[0] == P
    N, A = feat.shape
    C = Proto.shape[1]

    # ---- tiny prototype prep, hoisted out of the per-tile hot loop -------
    proto = Proto.astype(jnp.float32)
    pnorm = jnp.sqrt(jnp.sum(proto * proto, axis=-1, keepdims=True))
    proto_n = proto / jnp.maximum(pnorm, 1e-12)              # F.normalize per proto
    # fold the 1/(proto_aug_num+1) averaging and the 0.5 temperature in here
    psum = jnp.sum(proto_n, axis=0) * (1.0 / (P * 0.5))      # (C, A) f32

    # ---- tile / pad the pixel dimension ----------------------------------
    tile_n = min(max_tile_n, _round_up(N, 128))
    n_pad = _round_up(N, tile_n)
    num_tiles = n_pad // tile_n

    labels_i32 = labels.reshape(-1).astype(jnp.int32)
    if n_pad == N:
        feat_p = feat
        labels_row = labels_i32.reshape(1, N)
    else:
        # padded rows: zero features + ignore label (contribute 0 / 0)
        feat_p = jnp.zeros((n_pad, A), feat.dtype).at[:N].set(feat)
        labels_row = jnp.full((1, n_pad), 255, jnp.int32).at[0, :N].set(labels_i32)

    partials = pl.pallas_call(
        _proto_contrast_kernel,
        out_shape=jax.ShapeDtypeStruct((num_tiles, 1, 128), jnp.float32),
        grid=(num_tiles,),
        in_specs=[
            pl.BlockSpec((tile_n, A), lambda i: (i, 0)),     # feat tile
            pl.BlockSpec((C, A), lambda i: (0, 0)),          # psum, resident
            pl.BlockSpec((1, tile_n), lambda i: (0, i)),     # lane-dense labels
        ],
        out_specs=pl.BlockSpec((1, 1, 128), lambda i: (i, 0, 0)),
        compiler_params=pltpu.CompilerParams(
            dimension_semantics=("parallel",),
            vmem_limit_bytes=32 * 1024 * 1024),
    )(feat_p, psum, labels_row)

    loss_sum = jnp.sum(partials[:, 0, 0])
    count = jnp.sum(partials[:, 0, 1])
    # mean over non-ignored pixels (NaN if *every* pixel is ignored, same as torch)
    return loss_sum / count


def _reference(proto_aug_num, Proto, feat, labels):
    # pure-JAX reference mirroring the torch module (masking via weighting)
    valid = labels != 255
    feat = feat.astype(jnp.float32)
    feat_n = feat / jnp.maximum(jnp.linalg.norm(feat, axis=1, keepdims=True), 1e-12)
    logits = 0.0
    for i in range(proto_aug_num + 1):
        p = Proto[i].astype(jnp.float32)
        p_n = p / jnp.maximum(jnp.linalg.norm(p, axis=1, keepdims=True), 1e-12)
        logits = logits + feat_n @ p_n.T
    logits = logits / (proto_aug_num + 1) / 0.5
    safe_labels = jnp.where(valid, labels, 0)
    logp = jax.nn.log_softmax(logits, axis=1)
    per = -jnp.take_along_axis(logp, safe_labels[:, None], axis=1)[:, 0]
    w = valid.astype(jnp.float32)
    return jnp.sum(per * w) / jnp.sum(w)


if __name__ == "__main__":
    key = jax.random.PRNGKey(0)
    k1, k2, k3, k4 = jax.random.split(key, 4)

    # B=2, H=W=8 -> N = 128 pixels; feat_dim A = 32; C = 8 classes; proto_aug_num = 2
    proto_aug_num = 2
    N, A, C = 2 * 8 * 8, 32, 8

    feat = jax.random.normal(k1, (N, A), dtype=jnp.float32)
    Proto = jax.random.normal(k2, (proto_aug_num + 1, C, A), dtype=jnp.float32)
    labels = jax.random.randint(k3, (N,), 0, C, dtype=jnp.int32)
    # sprinkle some ignore labels (255)
    ignore = jax.random.bernoulli(k4, 0.1, (N,))
    labels = jnp.where(ignore, 255, labels)

    loss = prototype_contrastive_loss(proto_aug_num, Proto, feat, labels)
    loss = jax.block_until_ready(loss)

    ref = _reference(proto_aug_num, Proto, feat, labels)
    assert jnp.allclose(loss, ref, rtol=1e-5, atol=1e-5), (loss, ref)
    print("KERNEL_OK")
</pallas_src>

<mosaic_0001>
module attributes {stable_mosaic.version = 11 : i64} {
  func.func @_proto_contrast_kernel(%arg0: i32, %arg1: memref<128x32xf32, #tpu.memory_space<vmem>>, %arg2: memref<8x32xf32, #tpu.memory_space<vmem>>, %arg3: memref<1x128xi32, #tpu.memory_space<vmem>>, %arg4: memref<1x1x128xf32, #tpu.memory_space<vmem>>) attributes {dimension_semantics = [#tpu.dimension_semantics<parallel>], iteration_bounds = array<i64: 1>, scalar_prefetch = 0 : i64, scratch_operands = 0 : i64, tpu.core_type = #tpu.core_type<tc>, window_params = [{transform_indices = @transform_0, window_bounds = array<i64: 128, 32>}, {pipeline_mode = #tpu.pipeline_mode<synchronous>, transform_indices = @transform_1, window_bounds = array<i64: 8, 32>}, {transform_indices = @transform_2, window_bounds = array<i64: 1, 128>}, {transform_indices = @transform_3, window_bounds = array<i64: 1, 1, 128>}]} {
    %c0 = arith.constant 0 : index
    %c0_0 = arith.constant 0 : index
    %0 = vector.load %arg1[%c0, %c0_0] : memref<128x32xf32, #tpu.memory_space<vmem>>, vector<128x32xf32>
    %c0_1 = arith.constant 0 : index
    %c0_2 = arith.constant 0 : index
    %1 = vector.load %arg2[%c0_1, %c0_2] : memref<8x32xf32, #tpu.memory_space<vmem>>, vector<8x32xf32>
    %cst = arith.constant dense<0.000000e+00> : vector<8x128xf32>
    %2 = tpu.matmul %1, %0, %cst {dimension_numbers = #tpu.dot_dimension_numbers<[1], [1], [0], [0], [0, 0, 1, 0], [], []>} : vector<8x32xf32>, vector<128x32xf32>, vector<8x128xf32> -> vector<8x128xf32>
    %cst_3 = arith.constant 1.000000e+00 : f32
    %3 = vector.broadcast %cst_3 : f32 to vector<1x32xf32>
    %4 = arith.mulf %0, %0 : vector<128x32xf32>
    %cst_4 = arith.constant dense<0.000000e+00> : vector<1x128xf32>
    %5 = tpu.matmul %3, %4, %cst_4 {dimension_numbers = #tpu.dot_dimension_numbers<[1], [1], [0], [0], [0, 0, 1, 0], [], []>} : vector<1x32xf32>, vector<128x32xf32>, vector<1x128xf32> -> vector<1x128xf32>
    %cst_5 = arith.constant 1.000000e-24 : f32
    %6 = vector.broadcast %cst_5 : f32 to vector<1x128xf32>
    %7 = arith.maximumf %5, %6 : vector<1x128xf32>
    %8 = math.rsqrt %7 : vector<1x128xf32>
    %9 = vector.broadcast %8 : vector<1x128xf32> to vector<8x128xf32>
    %10 = arith.mulf %2, %9 : vector<8x128xf32>
    %c0_6 = arith.constant 0 : index
    %c0_7 = arith.constant 0 : index
    %11 = vector.load %arg3[%c0_6, %c0_7] : memref<1x128xi32, #tpu.memory_space<vmem>>, vector<1x128xi32>
    %c255_i32 = arith.constant 255 : i32
    %12 = vector.broadcast %c255_i32 : i32 to vector<1x128xi32>
    %13 = arith.cmpi ne, %11, %12 : vector<1x128xi32>
    %c0_i32 = arith.constant 0 : i32
    %14 = vector.broadcast %c0_i32 : i32 to vector<1x128xi32>
    %15 = arith.select %13, %11, %14 : vector<1x128xi1>, vector<1x128xi32>
    %16 = tpu.iota {dimensions = array<i32: 0>} : vector<8x128xi32>
    %17 = vector.broadcast %15 : vector<1x128xi32> to vector<8x128xi32>
    %18 = arith.cmpi eq, %16, %17 : vector<8x128xi32>
    %19 = arith.extui %18 : vector<8x128xi1> to vector<8x128xi32>
    %20 = arith.sitofp %19 : vector<8x128xi32> to vector<8x128xf32>
    %cst_8 = arith.constant dense<0xFF800000> : vector<128xf32>
    %21 = vector.multi_reduction <maximumf>, %10, %cst_8 [0] : vector<8x128xf32> to vector<128xf32>
    %22 = vector.shape_cast %21 : vector<128xf32> to vector<1x128xf32>
    %23 = vector.broadcast %22 : vector<1x128xf32> to vector<8x128xf32>
    %24 = arith.subf %10, %23 : vector<8x128xf32>
    %25 = math.exp %24 : vector<8x128xf32>
    %cst_9 = arith.constant dense<0.000000e+00> : vector<128xf32>
    %26 = vector.multi_reduction <add>, %25, %cst_9 [0] : vector<8x128xf32> to vector<128xf32>
    %27 = vector.shape_cast %26 : vector<128xf32> to vector<1x128xf32>
    %28 = math.log %27 : vector<1x128xf32>
    %29 = arith.addf %22, %28 : vector<1x128xf32>
    %30 = arith.mulf %10, %20 : vector<8x128xf32>
    %cst_10 = arith.constant dense<0.000000e+00> : vector<128xf32>
    %31 = vector.multi_reduction <add>, %30, %cst_10 [0] : vector<8x128xf32> to vector<128xf32>
    %32 = vector.shape_cast %31 : vector<128xf32> to vector<1x128xf32>
    %33 = arith.subf %29, %32 : vector<1x128xf32>
    %34 = arith.extui %13 : vector<1x128xi1> to vector<1x128xi32>
    %35 = arith.sitofp %34 : vector<1x128xi32> to vector<1x128xf32>
    %36 = arith.mulf %33, %35 : vector<1x128xf32>
    %37 = vector.shape_cast %36 : vector<1x128xf32> to vector<1x1x128xf32>
    %cst_11 = arith.constant dense<0.000000e+00> : vector<1xf32>
    %38 = vector.multi_reduction <add>, %37, %cst_11 [1, 2] : vector<1x1x128xf32> to vector<1xf32>
    %39 = vector.shape_cast %38 : vector<1xf32> to vector<1x1x1xf32>
    %40 = vector.extract %39[0, 0, 0] : f32 from vector<1x1x1xf32>
    %41 = vector.shape_cast %35 : vector<1x128xf32> to vector<1x1x128xf32>
    %cst_12 = arith.constant dense<0.000000e+00> : vector<1xf32>
    %42 = vector.multi_reduction <add>, %41, %cst_12 [1, 2] : vector<1x1x128xf32> to vector<1xf32>
    %43 = vector.shape_cast %42 : vector<1xf32> to vector<1x1x1xf32>
    %44 = vector.extract %43[0, 0, 0] : f32 from vector<1x1x1xf32>
    %45 = tpu.iota {dimensions = array<i32: 1>} : vector<1x128xi32>
    %c0_i32_13 = arith.constant 0 : i32
    %46 = vector.broadcast %c0_i32_13 : i32 to vector<1x128xi32>
    %47 = arith.cmpi eq, %45, %46 : vector<1x128xi32>
    %c1_i32 = arith.constant 1 : i32
    %48 = vector.broadcast %c1_i32 : i32 to vector<1x128xi32>
    %49 = arith.cmpi eq, %45, %48 : vector<1x128xi32>
    %cst_14 = arith.constant 0.000000e+00 : f32
    %50 = vector.broadcast %44 : f32 to vector<1x128xf32>
    %51 = vector.broadcast %cst_14 : f32 to vector<1x128xf32>
    %52 = arith.select %49, %50, %51 : vector<1x128xi1>, vector<1x128xf32>
    %53 = vector.broadcast %40 : f32 to vector<1x128xf32>
    %54 = arith.select %47, %53, %52 : vector<1x128xi1>, vector<1x128xf32>
    %c0_15 = arith.constant 0 : index
    %c0_16 = arith.constant 0 : index
    %c0_17 = arith.constant 0 : index
    %55 = vector.load %arg4[%c0_15, %c0_16, %c0_17] : memref<1x1x128xf32, #tpu.memory_space<vmem>>, vector<1x1x128xf32>
    %56 = vector.shape_cast %55 : vector<1x1x128xf32> to vector<1x128xf32>
    %57 = vector.shape_cast %54 : vector<1x128xf32> to vector<1x1x128xf32>
    tpu.vector_store %arg4[%c0_15, %c0_16, %c0_17], %57 {strides = array<i32>} : memref<1x1x128xf32, #tpu.memory_space<vmem>>, vector<1x1x128xf32>,
    return
  }
  func.func @transform_0(%arg0: i32) -> (i32, i32) {
    %c0_i32 = arith.constant 0 : i32
    %c0_i32_0 = arith.constant 0 : i32
    return %arg0, %c0_i32 : i32, i32
  }
  func.func @transform_1(%arg0: i32) -> (i32, i32) {
    %c0_i32 = arith.constant 0 : i32
    %c0_i32_0 = arith.constant 0 : i32
    %c0_i32_1 = arith.constant 0 : i32
    return %c0_i32, %c0_i32_0 : i32, i32
  }
  func.func @transform_2(%arg0: i32) -> (i32, i32) {
    %c0_i32 = arith.constant 0 : i32
    %c0_i32_0 = arith.constant 0 : i32
    return %c0_i32, %arg0 : i32, i32
  }
  func.func @transform_3(%arg0: i32) -> (i32, i32, i32) {
    %c0_i32 = arith.constant 0 : i32
    %c0_i32_0 = arith.constant 0 : i32
    %c0_i32_1 = arith.constant 0 : i32
    return %arg0, %c0_i32, %c0_i32_0 : i32, i32, i32
  }
}

</mosaic_0001>

<llo_original>
// kernel: tpu_custom_call.1
$region0: #{tpu_custom_call.1}
  #allocation0 [shape = 'u32[]', space=smem, size = 0x4, offset = 0x4, fixed_abs, tag = 'smem constant byte address 0x4 - core index']
  #allocation1 [shape = 'u32[144,128]{1,0:T(1,128)}', space=vmem, size = 0x12000, scoped, tag = 'internal scratch']
  %s0 = inlined_call_operand.vmem [shape: f32[128,32], index: 0, kind: input, shape index: {}]
  %s1 = inlined_call_operand.vmem [shape: f32[8,32], index: 1, kind: input, shape index: {}]
  %s2 = inlined_call_operand.vmem [shape: s32[1,128], index: 2, kind: input, shape index: {}]
  %s3 = inlined_call_operand.hbm [shape: f32[1,1,128], index: 3, kind: output, shape index: {}]
  %s4 = sld [smem:[#allocation0]]
  $region22: #{tpu_custom_call.1} parent=0
    _
  %s6 = ssub.s32 1, %s4
  %s7 = scalar_select 0, %s6, %s4
  $region1: #{tpu_custom_call.1} parent=0
    #allocation2 [shape = 'u8[512]{0}', space=vmem, size = 0x400, scoped, tag = 'output window, operand 0, single buffered']
    #allocation3 [shape = 's32[1]{0}', space=sflag, size = 0x4, scoped, tag = 'scoped memory for tpu_custom_call.1']
    %8 = vsyncpa [#allocation3], 0
    // Predicated region
    $region2: #{tpu_custom_call.1} parent=1 // pred_check
      _
    $region3: #{tpu_custom_call.1} parent=1 // pred_check_branch
      %10 = sbr.rel (0) target = $region5
    $region4: #{tpu_custom_call.1} parent=1 // pred_region
      _
    $region5: #{tpu_custom_call.1} parent=1 // pred_fallthru
      _
    // Predicated region
    $region6: #{tpu_custom_call.1} parent=1 // pred_check
      _
    $region7: #{tpu_custom_call.1} parent=1 // pred_check_branch
      %12 = sbr.rel (0) target = $region9
    $region8: #{tpu_custom_call.1} parent=1 // pred_region
      _
    $region9: #{tpu_custom_call.1} parent=1 // pred_fallthru
      _
    // Predicated region
    $region10: #{tpu_custom_call.1} parent=1 // pred_check
      _
    $region11: #{tpu_custom_call.1} parent=1 // pred_check_branch
      %14 = sbr.rel (0) target = $region13
    $region12: #{tpu_custom_call.1} parent=1 // pred_region
      _
    $region13: #{tpu_custom_call.1} parent=1 // pred_fallthru
      _
    %v15 = vld [vmem:[%s0] sm:$0xff]
    %v16 = vld [vmem:[%s0 + $0x8] sm:$0xff]
    %v17 = vld [vmem:[%s0 + $0x10] sm:$0xff]
    %v18 = vld [vmem:[%s0 + $0x18] sm:$0xff]
    %v19 = vld [vmem:[%s0 + $0x20] sm:$0xff]
    %v20 = vld [vmem:[%s0 + $0x28] sm:$0xff]
    %v21 = vld [vmem:[%s0 + $0x30] sm:$0xff]
    %v22 = vld [vmem:[%s0 + $0x38] sm:$0xff]
    %v23 = vld [vmem:[%s0 + $0x40] sm:$0xff]
    %v24 = vld [vmem:[%s0 + $0x48] sm:$0xff]
    %v25 = vld [vmem:[%s0 + $0x50] sm:$0xff]
    %v26 = vld [vmem:[%s0 + $0x58] sm:$0xff]
    %v27 = vld [vmem:[%s0 + $0x60] sm:$0xff]
    %v28 = vld [vmem:[%s0 + $0x68] sm:$0xff]
    %v29 = vld [vmem:[%s0 + $0x70] sm:$0xff]
    %v30 = vld [vmem:[%s0 + $0x78] sm:$0xff]
    %v31 = vld [vmem:[%s1] sm:$0xff]
    %vm32 = vcmask 261120
    %v34 = vsel %vm32, %v31, 0
    %v37 = vsel %vm32, %v15, 0
    %v40 = vsel %vm32, %v16, 0
    %v43 = vsel %vm32, %v17, 0
    %v46 = vsel %vm32, %v18, 0
    %v49 = vsel %vm32, %v19, 0
    %v52 = vsel %vm32, %v20, 0
    %v55 = vsel %vm32, %v21, 0
    %v58 = vsel %vm32, %v22, 0
    %v61 = vsel %vm32, %v23, 0
    %v64 = vsel %vm32, %v24, 0
    %v67 = vsel %vm32, %v25, 0
    %v70 = vsel %vm32, %v26, 0
    %v73 = vsel %vm32, %v27, 0
    %v76 = vsel %vm32, %v28, 0
    %v79 = vsel %vm32, %v29, 0
    %v82 = vsel %vm32, %v30, 0
    %84 = vmatprep.subr.mxu0 0.0
    %85 = vmatpush1.xpose.msra.mxu0 %v82
    %86 = vmatprep.subr.mxu0 0.0
    %87 = vmatpush1.xpose.msra.mxu0 %v79
    %88 = vmatprep.subr.mxu0 0.0
    %89 = vmatpush1.xpose.msra.mxu0 %v76
    %90 = vmatprep.subr.mxu0 0.0
    %91 = vmatpush1.xpose.msra.mxu0 %v73
    %92 = vmatprep.subr.mxu0 0.0
    %93 = vmatpush1.xpose.msra.mxu0 %v70
    %94 = vmatprep.subr.mxu0 0.0
    %95 = vmatpush1.xpose.msra.mxu0 %v67
    %96 = vmatprep.subr.mxu0 0.0
    %97 = vmatpush1.xpose.msra.mxu0 %v64
    %98 = vmatprep.subr.mxu0 0.0
    %99 = vmatpush1.xpose.msra.mxu0 %v61
    %100 = vmatprep.subr.mxu0 0.0
    %101 = vmatpush1.xpose.msra.mxu0 %v58
    %102 = vmatprep.subr.mxu0 0.0
    %103 = vmatpush1.xpose.msra.mxu0 %v55
    %104 = vmatprep.subr.mxu0 0.0
    %105 = vmatpush1.xpose.msra.mxu0 %v52
    %106 = vmatprep.subr.mxu0 0.0
    %107 = vmatpush1.xpose.msra.mxu0 %v49
    %108 = vmatprep.subr.mxu0 0.0
    %109 = vmatpush1.xpose.msra.mxu0 %v46
    %110 = vmatprep.subr.mxu0 0.0
    %111 = vmatpush1.xpose.msra.mxu0 %v43
    %112 = vmatprep.subr.mxu0 0.0
    %113 = vmatpush1.xpose.msra.mxu0 %v40
    %114 = vmatprep.subr.mxu0 0.0
    %115 = vmatpush1.xpose.msra.mxu0 %v37
    %116 = vmatprep.subr.mxu0 0.0
    %117 = vmatpush2.xpose.msra.mxu0 0.0
    %118 = vmatprep.subr.mxu0 0.0
    %119 = vmatpush2.xpose.msra.mxu0 0.0
    %120 = vmatprep.subr.mxu0 0.0
    %121 = vmatpush2.xpose.msra.mxu0 0.0
    %122 = vmatprep.subr.mxu0 0.0
    %123 = vmatpush2.xpose.msra.mxu0 0.0
    %124 = vmatprep.subr.mxu0 0.0
    %125 = vmatpush2.xpose.msra.mxu0 0.0
    %126 = vmatprep.subr.mxu0 0.0
    %127 = vmatpush2.xpose.msra.mxu0 0.0
    %128 = vmatprep.subr.mxu0 0.0
    %129 = vmatpush2.xpose.msra.mxu0 0.0
    %130 = vmatprep.subr.mxu0 0.0
    %131 = vmatpush2.xpose.msra.mxu0 0.0
    %132 = vmatprep.subr.mxu0 0.0
    %133 = vmatpush2.xpose.msra.mxu0 0.0
    %134 = vmatprep.subr.mxu0 0.0
    %135 = vmatpush2.xpose.msra.mxu0 0.0
    %136 = vmatprep.subr.mxu0 0.0
    %137 = vmatpush2.xpose.msra.mxu0 0.0
    %138 = vmatprep.subr.mxu0 0.0
    %139 = vmatpush2.xpose.msra.mxu0 0.0
    %140 = vmatprep.subr.mxu0 0.0
    %141 = vmatpush2.xpose.msra.mxu0 0.0
    %142 = vmatprep.subr.mxu0 0.0
    %143 = vmatpush2.xpose.msra.mxu0 0.0
    %144 = vmatprep.subr.mxu0 0.0
    %145 = vmatpush2.xpose.msra.mxu0 0.0
    %146 = vmatprep.subr.mxu0 0.0
    %147 = vmatpush2.xpose.msra.mxu0 0.0
    %148 = vmatprep.mubr.f32.mxu0 0.0
    %149 = vmatmul.mubr.f32.gmra.mxu0 %v34
    %v150 = vpop.f32.mrf.mxu0
    %v151 = vadd.f32 0.0, %v150
    %v152 = vpop.f32.mrf.mxu0
    %153 = vdwg.mxu0
    %v154 = vmul.f32 %v15, %v15
    %v155 = vmul.f32 %v16, %v16
    %v156 = vmul.f32 %v17, %v17
    %v157 = vmul.f32 %v18, %v18
    %v158 = vmul.f32 %v19, %v19
    %v159 = vmul.f32 %v20, %v20
    %v160 = vmul.f32 %v21, %v21
    %v161 = vmul.f32 %v22, %v22
    %v162 = vmul.f32 %v23, %v23
    %v163 = vmul.f32 %v24, %v24
    %v164 = vmul.f32 %v25, %v25
    %v165 = vmul.f32 %v26, %v26
    %v166 = vmul.f32 %v27, %v27
    %v167 = vmul.f32 %v28, %v28
    %v168 = vmul.f32 %v29, %v29
    %v169 = vmul.f32 %v30, %v30
    %v171 = vsel %vm32, 1.0, 0
    %v174 = vsel %vm32, %v154, 0
    %v177 = vsel %vm32, %v155, 0
    %v180 = vsel %vm32, %v156, 0
    %v183 = vsel %vm32, %v157, 0
    %v186 = vsel %vm32, %v158, 0
    %v189 = vsel %vm32, %v159, 0
    %v192 = vsel %vm32, %v160, 0
    %v195 = vsel %vm32, %v161, 0
    %v198 = vsel %vm32, %v162, 0
    %v201 = vsel %vm32, %v163, 0
    %v204 = vsel %vm32, %v164, 0
    %v207 = vsel %vm32, %v165, 0
    %v210 = vsel %vm32, %v166, 0
    %v213 = vsel %vm32, %v167, 0
    %v216 = vsel %vm32, %v168, 0
    %v219 = vsel %vm32, %v169, 0
    %221 = vmatprep.subr.mxu0 0.0
    %222 = vmatpush1.xpose.msra.mxu0 %v219
    %223 = vmatprep.subr.mxu0 0.0
    %224 = vmatpush1.xpose.msra.mxu0 %v216
    %225 = vmatprep.subr.mxu0 0.0
    %226 = vmatpush1.xpose.msra.mxu0 %v213
    %227 = vmatprep.subr.mxu0 0.0
    %228 = vmatpush1.xpose.msra.mxu0 %v210
    %229 = vmatprep.subr.mxu0 0.0
    %230 = vmatpush1.xpose.msra.mxu0 %v207
    %231 = vmatprep.subr.mxu0 0.0
    %232 = vmatpush1.xpose.msra.mxu0 %v204
    %233 = vmatprep.subr.mxu0 0.0
    %234 = vmatpush1.xpose.msra.mxu0 %v201
    %235 = vmatprep.subr.mxu0 0.0
    %236 = vmatpush1.xpose.msra.mxu0 %v198
    %237 = vmatprep.subr.mxu0 0.0
    %238 = vmatpush1.xpose.msra.mxu0 %v195
    %239 = vmatprep.subr.mxu0 0.0
    %240 = vmatpush1.xpose.msra.mxu0 %v192
    %241 = vmatprep.subr.mxu0 0.0
    %242 = vmatpush1.xpose.msra.mxu0 %v189
    %243 = vmatprep.subr.mxu0 0.0
    %244 = vmatpush1.xpose.msra.mxu0 %v186
    %245 = vmatprep.subr.mxu0 0.0
    %246 = vmatpush1.xpose.msra.mxu0 %v183
    %247 = vmatprep.subr.mxu0 0.0
    %248 = vmatpush1.xpose.msra.mxu0 %v180
    %249 = vmatprep.subr.mxu0 0.0
    %250 = vmatpush1.xpose.msra.mxu0 %v177
    %251 = vmatprep.subr.mxu0 0.0
    %252 = vmatpush1.xpose.msra.mxu0 %v174
    %253 = vmatprep.subr.mxu0 0.0
    %254 = vmatpush2.xpose.msra.mxu0 0.0
    %255 = vmatprep.subr.mxu0 0.0
    %256 = vmatpush2.xpose.msra.mxu0 0.0
    %257 = vmatprep.subr.mxu0 0.0
    %258 = vmatpush2.xpose.msra.mxu0 0.0
    %259 = vmatprep.subr.mxu0 0.0
    %260 = vmatpush2.xpose.msra.mxu0 0.0
    %261 = vmatprep.subr.mxu0 0.0
    %262 = vmatpush2.xpose.msra.mxu0 0.0
    %263 = vmatprep.subr.mxu0 0.0
    %264 = vmatpush2.xpose.msra.mxu0 0.0
    %265 = vmatprep.subr.mxu0 0.0
    %266 = vmatpush2.xpose.msra.mxu0 0.0
    %267 = vmatprep.subr.mxu0 0.0
    %268 = vmatpush2.xpose.msra.mxu0 0.0
    %269 = vmatprep.subr.mxu0 0.0
    %270 = vmatpush2.xpose.msra.mxu0 0.0
    %271 = vmatprep.subr.mxu0 0.0
    %272 = vmatpush2.xpose.msra.mxu0 0.0
    %273 = vmatprep.subr.mxu0 0.0
    %274 = vmatpush2.xpose.msra.mxu0 0.0
    %275 = vmatprep.subr.mxu0 0.0
    %276 = vmatpush2.xpose.msra.mxu0 0.0
    %277 = vmatprep.subr.mxu0 0.0
    %278 = vmatpush2.xpose.msra.mxu0 0.0
    %279 = vmatprep.subr.mxu0 0.0
    %280 = vmatpush2.xpose.msra.mxu0 0.0
    %281 = vmatprep.subr.mxu0 0.0
    %282 = vmatpush2.xpose.msra.mxu0 0.0
    %283 = vmatprep.subr.mxu0 0.0
    %284 = vmatpush2.xpose.msra.mxu0 0.0
    %285 = vmatprep.mubr.f32.mxu0 0.0
    %286 = vmatmul.mubr.f32.gmra.mxu0 %v171
    %v287 = vpop.f32.mrf.mxu0
    %v288 = vadd.f32 0.0, %v287
    %v289 = vpop.f32.mrf.mxu0
    %290 = vdwg.mxu0
    %v291 = vmax.f32 %v288, 1e-24
    %v292 = vrsqrt.pop %v291
    %v293 = vlaneseq
    %v294 = vshrl.u32 %v293, 7
    %v295 = vsub.s32 0, %v294
    %v296 = vrot.slane %v292, %v295
    %v297 = vmul.f32 %v151, %v296
    %v298 = vld [vmem:[%s2] sm:$0x1]
    %vm299 = vcmp.ne.s32.totalorder %v298, 255
    %v300 = vsel %vm299, %v298, 0
    %v301 = vlaneseq
    %v302 = vshrl.u32 %v301, 7
    %v303 = vlaneseq
    %v304 = vshrl.u32 %v303, 7
    %v305 = vsub.s32 0, %v304
    %v306 = vrot.slane %v300, %v305
    %vm307 = vcmp.eq.s32.totalorder %v302, %v306
    %v308 = vsel %vm307, 1, 0
    %v309 = vcvt.s32.f32 %v308
    %v310 = vrot.slane %v297, 4
    %v311 = vmax.f32 %v297, %v310
    %v312 = vrot.slane %v311, 2
    %v313 = vmax.f32 %v311, %v312
    %v314 = vrot.slane %v313, 1
    %v315 = vmax.f32 %v313, %v314
    %v316 = vsub.f32 %v297, %v315
    %v317 = vmul.f32 %v316, 1.442695
    %v318 = vpow.pop %v317
    %v319 = vrot.slane %v318, 4
    %v320 = vadd.f32 %v318, %v319
    %v321 = vrot.slane %v320, 2
    %v322 = vadd.f32 %v320, %v321
    %v323 = vrot.slane %v322, 1
    %v324 = vadd.f32 %v322, %v323
    %v325 = vlog2.pop %v324
    %v326 = vmul.f32 %v325, 0.6931472
    %v327 = vadd.f32 %v315, %v326
    %v328 = vmul.f32 %v297, %v309
    %v329 = vrot.slane %v328, 4
    %v330 = vadd.f32 %v328, %v329
    %v331 = vrot.slane %v330, 2
    %v332 = vadd.f32 %v330, %v331
    %v333 = vrot.slane %v332, 1
    %v334 = vadd.f32 %v332, %v333
    %v335 = vsub.f32 %v327, %v334
    %v336 = vsel %vm299, 1, 0
    %v337 = vcvt.s32.f32 %v336
    %v338 = vmul.f32 %v335, %v337
    %vm339 = vcmask 1040384
    %v340 = vsel %vm339, %v338, 0.0
    %341 = vadd.xlane.f32.xlu0 %v340
    %v342 = vpop.xlane.xlu0 %341
    %v343 = vrot.slane %v342, 4
    %v344 = vadd.f32 %v342, %v343
    %v345 = vrot.slane %v344, 2
    %v346 = vadd.f32 %v344, %v345
    %v347 = vrot.slane %v346, 1
    %v348 = vadd.f32 %v346, %v347
    %s349 = vtos %v348
    %v350 = vsel %vm339, %v337, 0.0
    %351 = vadd.xlane.f32.xlu0 %v350
    %v352 = vpop.xlane.xlu0 %351
    %v353 = vrot.slane %v352, 4
    %v354 = vadd.f32 %v352, %v353
    %v355 = vrot.slane %v354, 2
    %v356 = vadd.f32 %v354, %v355
    %v357 = vrot.slane %v356, 1
    %v358 = vadd.f32 %v356, %v357
    %s359 = vtos %v358
    %v360 = vlaneseq
    %v361 = vand.u32 %v360, 127
    %vm362 = vcmp.eq.s32.totalorder %v361, 0
    %vm363 = vcmp.eq.s32.totalorder %v361, 1
    %v364 = vstv %s359
    %v365 = vsel %vm363, %v364, 0.0
    %v366 = vstv %s349
    %v367 = vsel %vm362, %v366, %v365
    %368 = vst [vmem:[#allocation2] sm:$0x1] %v367
    // Predicated region
    $region14: #{tpu_custom_call.1} parent=1 // pred_check
      _
    $region15: #{tpu_custom_call.1} parent=1 // pred_check_branch
      %370 = sbr.rel (0) target = $region17
    $region16: #{tpu_custom_call.1} parent=1 // pred_region
      %s372 = ssub.s32 16, 16
      %373 = vsyncadd [#allocation3], %s372
      %s375 = sshll.u32 [#allocation2], 4
      %s376 = int_to_ptr.vmem [resolvable:$true] %s375
      %378 = dma.vmem_to_hbm [thread:$0]  %s376, 16, %s3, [#allocation3]
    $region17: #{tpu_custom_call.1} parent=1 // pred_fallthru
      _
    // Predicated region
    $region18: #{tpu_custom_call.1} parent=1 // pred_check
      _
    $region19: #{tpu_custom_call.1} parent=1 // pred_check_branch
      %380 = sbr.rel (0) target = $region21
    $region20: #{tpu_custom_call.1} parent=1 // pred_region
      %381 = dma.done [#allocation3], 16
    $region21: #{tpu_custom_call.1} parent=1 // pred_fallthru
      _
    %382 = vsyncpa [#allocation3], 1

</llo_original>
